<compile_context>
chip_gen: v5e
topology: v5e:2x2
jax: 0.10.0
libtpu: 0.0.40
codegen_flags: <defaults>
</compile_context>

<pallas_src>
import jax
import jax.numpy as jnp
from jax.experimental import pallas as pl
from jax.experimental.pallas import tpu as pltpu


def _round_up(n, m):
    return ((n + m - 1) // m) * m


def _affine_deinterleave_kernel(b_ref, w_ref, x_ref, o_ref):
    # b_ref: SMEM f32[1]          folded bias
    # w_ref: VMEM f32[256, 128]   de-interleave + folded weights (resident: constant index map)
    # x_ref: VMEM f32[rows, 256]  native [N,2] data viewed as a lane-interleaved slab
    # o_ref: VMEM f32[rows, 128]  dense output, sample n -> (n // 128, n % 128)
    y = jnp.dot(x_ref[...], w_ref[...], preferred_element_type=jnp.float32)
    o_ref[...] = (y + b_ref[0]).astype(o_ref.dtype)


def circles_v3_forward(x, w1, b1, w2, b2, *, rows_per_tile=2048):
    """Forward pass of Circles_v3.

    x:  [N, 2]  float32 (PyTorch nn.Linear convention: batch-major)
    w1: [2, 5]  (torch weight [5,2] transposed)    b1: [1, 5]
    w2: [5, 1]  (torch weight [1,5] transposed)    b2: [1, 1]
    returns [N, 1] float32
    """
    N, f_in = x.shape
    assert f_in == 2

    # --- Fold the two linear layers (exact: no nonlinearity in between). ---
    w_eff = (w1 @ w2).astype(jnp.float32)           # [2, 1]
    b_eff = (b1 @ w2 + b2).astype(jnp.float32)      # [1, 1]
    bias = b_eff.reshape(1)

    # --- De-interleave + weight matrix: W[2j, j] = w0, W[2j+1, j] = w1. ---
    f_idx = jnp.arange(256, dtype=jnp.int32)[:, None]   # flat lane index within a slab row
    j_idx = jnp.arange(128, dtype=jnp.int32)[None, :]   # sample index within a slab row
    W = (jnp.where(f_idx == 2 * j_idx, w_eff[0, 0], 0.0)
         + jnp.where(f_idx == 2 * j_idx + 1, w_eff[1, 0], 0.0)).astype(jnp.float32)

    # --- View x (row-major [N,2]) as a [R, 256] slab. Pad only to the 128-sample
    #     quantum; when N % 128 == 0 this is a pure metadata reshape (no copy). ---
    n_pad = _round_up(N, 128)
    x_flat = x.reshape(-1)
    if n_pad != N:
        x_flat = jnp.concatenate(
            [x_flat, jnp.zeros((2 * (n_pad - N),), x.dtype)])
    R = n_pad // 128
    x_slab = x_flat.reshape(R, 256).astype(jnp.float32)

    # --- Tile size: big dense tiles, and >=2 grid steps whenever possible so the
    #     "parallel" axis can shard across v7x's two TensorCores. ---
    if R <= 8:
        rt = R                                            # single full-extent block
    else:
        rt = min(rows_per_tile, _round_up((R + 1) // 2, 8))  # multiple of 8, >=2 steps
    grid = (pl.cdiv(R, rt),)

    out = pl.pallas_call(
        _affine_deinterleave_kernel,
        out_shape=jax.ShapeDtypeStruct((R, 128), jnp.float32),
        grid_spec=pltpu.PrefetchScalarGridSpec(
            num_scalar_prefetch=0,
            grid=grid,
            in_specs=[
                # Folded bias: whole tiny array resident in SMEM (no per-step DMA).
                pl.BlockSpec(memory_space=pltpu.MemorySpace.SMEM),
                # De-interleave/weight matrix: constant index map -> stays resident.
                pl.BlockSpec((256, 128), lambda i: (0, 0)),
                # x tile: dense [rows, 256] slab of the native interleaved data.
                pl.BlockSpec((rt, 256), lambda i: (i, 0)),
            ],
            out_specs=pl.BlockSpec((rt, 128), lambda i: (i, 0)),
        ),
        compiler_params=pltpu.CompilerParams(
            dimension_semantics=("parallel",),
        ),
    )(bias, W, x_slab)

    # --- Restore [N, 1]. Free (reshape only) when N % 128 == 0. ---
    return out.reshape(-1)[:N].reshape(N, 1)


def init_params(key):
    """Deterministic init mimicking PyTorch's default Linear init
    (uniform in [-1/sqrt(fan_in), 1/sqrt(fan_in)])."""
    k1, k2, k3, k4 = jax.random.split(key, 4)
    bound1 = 1.0 / jnp.sqrt(2.0)   # layer 1: fan_in = 2
    bound2 = 1.0 / jnp.sqrt(5.0)   # layer 2: fan_in = 5
    # Stored already transposed: [in, out]
    w1 = jax.random.uniform(k1, (2, 5), jnp.float32, -bound1, bound1)
    b1 = jax.random.uniform(k2, (1, 5), jnp.float32, -bound1, bound1)
    w2 = jax.random.uniform(k3, (5, 1), jnp.float32, -bound2, bound2)
    b2 = jax.random.uniform(k4, (1, 1), jnp.float32, -bound2, bound2)
    return w1, b1, w2, b2


if __name__ == "__main__":
    key = jax.random.PRNGKey(0)
    k_x, k_p = jax.random.split(key)

    # Small batch consistent with the module (e.g. make_circles n_samples=1000);
    # also exercises the 128-sample tail-padding path (1000 -> 1024).
    N = 1000
    x = jax.random.normal(k_x, (N, 2), jnp.float32)
    w1, b1, w2, b2 = init_params(k_p)

    fwd = jax.jit(circles_v3_forward)
    out = jax.block_until_ready(fwd(x, w1, b1, w2, b2))

    # Pure-JAX reference (unfolded, matches the PyTorch module exactly).
    ref = (x @ w1 + b1) @ w2 + b2
    assert out.shape == (N, 1)
    # Expected max error is ~1e-6 (f32 operands keep the MXU on its f32
    # multi-pass path, and the fold only reassociates a 5-term sum).  The
    # tolerance is kept loose so the check stays robust if a TPU generation /
    # XLA default lowers an f32 matmul via a reduced-precision pass.
    err = jnp.max(jnp.abs(out - ref))
    assert jnp.allclose(out, ref, atol=1e-2, rtol=1e-2), f"mismatch vs reference: {err}"

    print("KERNEL_OK")
</pallas_src>

<mosaic_0001>
module attributes {stable_mosaic.version = 11 : i64} {
  func.func @_affine_deinterleave_kernel(%arg0: i32, %arg1: memref<1xf32, #tpu.memory_space<smem>>, %arg2: memref<256x128xf32, #tpu.memory_space<vmem>>, %arg3: memref<8x256xf32, #tpu.memory_space<vmem>>, %arg4: memref<8x128xf32, #tpu.memory_space<vmem>>) attributes {dimension_semantics = [#tpu.dimension_semantics<parallel>], iteration_bounds = array<i64: 1>, scalar_prefetch = 0 : i64, scratch_operands = 0 : i64, tpu.core_type = #tpu.core_type<tc>, window_params = [{transform_indices = @transform_0, window_bounds = array<i64: 1>}, {pipeline_mode = #tpu.pipeline_mode<synchronous>, transform_indices = @transform_1, window_bounds = array<i64: 256, 128>}, {transform_indices = @transform_2, window_bounds = array<i64: 8, 256>}, {transform_indices = @transform_3, window_bounds = array<i64: 8, 128>}]} {
    %c0 = arith.constant 0 : index
    %c0_0 = arith.constant 0 : index
    %0 = vector.load %arg3[%c0, %c0_0] : memref<8x256xf32, #tpu.memory_space<vmem>>, vector<8x256xf32>
    %c0_1 = arith.constant 0 : index
    %c0_2 = arith.constant 0 : index
    %1 = vector.load %arg2[%c0_1, %c0_2] : memref<256x128xf32, #tpu.memory_space<vmem>>, vector<256x128xf32>
    %cst = arith.constant dense<0.000000e+00> : vector<8x128xf32>
    %2 = tpu.matmul %0, %1, %cst {dimension_numbers = #tpu.dot_dimension_numbers<[1], [0], [0], [1], [0, 0, 1, 1], [], []>} : vector<8x256xf32>, vector<256x128xf32>, vector<8x128xf32> -> vector<8x128xf32>
    %c0_3 = arith.constant 0 : index
    %3 = memref.load %arg1[%c0_3] : memref<1xf32, #tpu.memory_space<smem>>
    %4 = vector.broadcast %3 : f32 to vector<8x128xf32>
    %5 = arith.addf %2, %4 : vector<8x128xf32>
    %c0_4 = arith.constant 0 : index
    %c0_5 = arith.constant 0 : index
    %6 = vector.load %arg4[%c0_4, %c0_5] : memref<8x128xf32, #tpu.memory_space<vmem>>, vector<8x128xf32>
    tpu.vector_store %arg4[%c0_4, %c0_5], %5 {strides = array<i32>} : memref<8x128xf32, #tpu.memory_space<vmem>>, vector<8x128xf32>,
    return
  }
  func.func @transform_0(%arg0: i32) -> i32 {
    %c0_i32 = arith.constant 0 : i32
    %c0_i32_0 = arith.constant 0 : i32
    return %c0_i32 : i32
  }
  func.func @transform_1(%arg0: i32) -> (i32, i32) {
    %c0_i32 = arith.constant 0 : i32
    %c0_i32_0 = arith.constant 0 : i32
    %c0_i32_1 = arith.constant 0 : i32
    return %c0_i32, %c0_i32_0 : i32, i32
  }
  func.func @transform_2(%arg0: i32) -> (i32, i32) {
    %c0_i32 = arith.constant 0 : i32
    %c0_i32_0 = arith.constant 0 : i32
    return %arg0, %c0_i32 : i32, i32
  }
  func.func @transform_3(%arg0: i32) -> (i32, i32) {
    %c0_i32 = arith.constant 0 : i32
    %c0_i32_0 = arith.constant 0 : i32
    return %arg0, %c0_i32 : i32, i32
  }
}

</mosaic_0001>

<llo_original>
// kernel: circles_v3_forward.1
$region0: #{circles_v3_forward.1}
  #allocation0 [shape = 'u32[]', space=smem, size = 0x4, offset = 0x4, fixed_abs, tag = 'smem constant byte address 0x4 - core index']
  #allocation1 [shape = 'u32[72,128]{1,0:T(1,128)}', space=vmem, size = 0x9000, scoped, tag = 'internal scratch']
  #allocation2 [shape = 'f32[1]{0:T(128)S(6)}', space=smem, size = 0x200, scoped, tag = 'scoped memory for circles_v3_forward.1']
  %s0 = inlined_call_operand.<no memory space> [shape: f32[1], index: 0, kind: input, shape index: {}]
  %s1 = inlined_call_operand.vmem [shape: f32[256,128], index: 1, kind: input, shape index: {}]
  %s2 = inlined_call_operand.vmem [shape: f32[8,256], index: 2, kind: input, shape index: {}]
  %s3 = inlined_call_operand.hbm [shape: f32[8,128], index: 3, kind: output, shape index: {}]
  %s4 = sld [smem:[#allocation0]]
  $region22: #{circles_v3_forward.1} parent=0
    _
  %s6 = ssub.s32 1, %s4
  %s7 = scalar_select 0, %s6, %s4
  %8 = sst [smem:[#allocation2]] %s0
  $region1: #{circles_v3_forward.1} parent=0
    #allocation3 [shape = 'u8[4096]{0}', space=vmem, size = 0x1000, scoped, tag = 'output window, operand 0, single buffered']
    #allocation4 [shape = 's32[1]{0}', space=sflag, size = 0x4, scoped, tag = 'scoped memory for circles_v3_forward.1']
    %9 = vsyncpa [#allocation4], 0
    // Predicated region
    $region2: #{circles_v3_forward.1} parent=1 // pred_check
      _
    $region3: #{circles_v3_forward.1} parent=1 // pred_check_branch
      %11 = sbr.rel (0) target = $region5
    $region4: #{circles_v3_forward.1} parent=1 // pred_region
      _
    $region5: #{circles_v3_forward.1} parent=1 // pred_fallthru
      _
    // Predicated region
    $region6: #{circles_v3_forward.1} parent=1 // pred_check
      _
    $region7: #{circles_v3_forward.1} parent=1 // pred_check_branch
      %13 = sbr.rel (0) target = $region9
    $region8: #{circles_v3_forward.1} parent=1 // pred_region
      _
    $region9: #{circles_v3_forward.1} parent=1 // pred_fallthru
      _
    // Predicated region
    $region10: #{circles_v3_forward.1} parent=1 // pred_check
      _
    $region11: #{circles_v3_forward.1} parent=1 // pred_check_branch
      %15 = sbr.rel (0) target = $region13
    $region12: #{circles_v3_forward.1} parent=1 // pred_region
      _
    $region13: #{circles_v3_forward.1} parent=1 // pred_fallthru
      _
    %v16 = vld [vmem:[%s2] sm:$0xff]
    %v17 = vld [vmem:[%s2 + $0x8] sm:$0xff]
    %v18 = vld [vmem:[%s1] sm:$0xff]
    %v19 = vld [vmem:[%s1 + $0x8] sm:$0xff]
    %v20 = vld [vmem:[%s1 + $0x10] sm:$0xff]
    %v21 = vld [vmem:[%s1 + $0x18] sm:$0xff]
    %v22 = vld [vmem:[%s1 + $0x20] sm:$0xff]
    %v23 = vld [vmem:[%s1 + $0x28] sm:$0xff]
    %v24 = vld [vmem:[%s1 + $0x30] sm:$0xff]
    %v25 = vld [vmem:[%s1 + $0x38] sm:$0xff]
    %v26 = vld [vmem:[%s1 + $0x40] sm:$0xff]
    %v27 = vld [vmem:[%s1 + $0x48] sm:$0xff]
    %v28 = vld [vmem:[%s1 + $0x50] sm:$0xff]
    %v29 = vld [vmem:[%s1 + $0x58] sm:$0xff]
    %v30 = vld [vmem:[%s1 + $0x60] sm:$0xff]
    %v31 = vld [vmem:[%s1 + $0x68] sm:$0xff]
    %v32 = vld [vmem:[%s1 + $0x70] sm:$0xff]
    %v33 = vld [vmem:[%s1 + $0x78] sm:$0xff]
    %v34 = vld [vmem:[%s1 + $0x80] sm:$0xff]
    %v35 = vld [vmem:[%s1 + $0x88] sm:$0xff]
    %v36 = vld [vmem:[%s1 + $0x90] sm:$0xff]
    %v37 = vld [vmem:[%s1 + $0x98] sm:$0xff]
    %v38 = vld [vmem:[%s1 + $0xa0] sm:$0xff]
    %v39 = vld [vmem:[%s1 + $0xa8] sm:$0xff]
    %v40 = vld [vmem:[%s1 + $0xb0] sm:$0xff]
    %v41 = vld [vmem:[%s1 + $0xb8] sm:$0xff]
    %v42 = vld [vmem:[%s1 + $0xc0] sm:$0xff]
    %v43 = vld [vmem:[%s1 + $0xc8] sm:$0xff]
    %v44 = vld [vmem:[%s1 + $0xd0] sm:$0xff]
    %v45 = vld [vmem:[%s1 + $0xd8] sm:$0xff]
    %v46 = vld [vmem:[%s1 + $0xe0] sm:$0xff]
    %v47 = vld [vmem:[%s1 + $0xe8] sm:$0xff]
    %v48 = vld [vmem:[%s1 + $0xf0] sm:$0xff]
    %v49 = vld [vmem:[%s1 + $0xf8] sm:$0xff]
    %s50 = sld [smem:[#allocation2]]
    %v51 = vstv %s50
    %52 = vmatpush.msra.mxu0 %v33
    %53 = vmatpush.msra.mxu0 %v32
    %54 = vmatpush.msra.mxu0 %v31
    %55 = vmatpush.msra.mxu0 %v30
    %56 = vmatpush.msra.mxu0 %v29
    %57 = vmatpush.msra.mxu0 %v28
    %58 = vmatpush.msra.mxu0 %v27
    %59 = vmatpush.msra.mxu0 %v26
    %60 = vmatpush.msra.mxu0 %v25
    %61 = vmatpush.msra.mxu0 %v24
    %62 = vmatpush.msra.mxu0 %v23
    %63 = vmatpush.msra.mxu0 %v22
    %64 = vmatpush.msra.mxu0 %v21
    %65 = vmatpush.msra.mxu0 %v20
    %66 = vmatpush.msra.mxu0 %v19
    %67 = vmatpush.msra.mxu0 %v18
    %68 = vmatmul.f32.gmra.mxu0 %v16
    %v69 = vpop.f32.mrf.mxu0
    %v70 = vadd.f32 %v51, %v69
    %71 = vdwg.mxu0
    %72 = vmatpush.msra.mxu0 %v49
    %73 = vmatpush.msra.mxu0 %v48
    %74 = vmatpush.msra.mxu0 %v47
    %75 = vmatpush.msra.mxu0 %v46
    %76 = vmatpush.msra.mxu0 %v45
    %77 = vmatpush.msra.mxu0 %v44
    %78 = vmatpush.msra.mxu0 %v43
    %79 = vmatpush.msra.mxu0 %v42
    %80 = vmatpush.msra.mxu0 %v41
    %81 = vmatpush.msra.mxu0 %v40
    %82 = vmatpush.msra.mxu0 %v39
    %83 = vmatpush.msra.mxu0 %v38
    %84 = vmatpush.msra.mxu0 %v37
    %85 = vmatpush.msra.mxu0 %v36
    %86 = vmatpush.msra.mxu0 %v35
    %87 = vmatpush.msra.mxu0 %v34
    %88 = vmatmul.f32.gmra.mxu0 %v17
    %v89 = vpop.f32.mrf.mxu0
    %v90 = vadd.f32 %v70, %v89
    %91 = vdwg.mxu0
    %92 = vst [vmem:[#allocation3] sm:$0xff] %v90
    // Predicated region
    $region14: #{circles_v3_forward.1} parent=1 // pred_check
      _
    $region15: #{circles_v3_forward.1} parent=1 // pred_check_branch
      %94 = sbr.rel (0) target = $region17
    $region16: #{circles_v3_forward.1} parent=1 // pred_region
      %96 = vsyncadd [#allocation4], 0
      %s98 = sshll.u32 [#allocation3], 4
      %s99 = int_to_ptr.vmem [resolvable:$true] %s98
      %s100 = sshll.u32 %s3, 4
      %s101 = int_to_ptr.hbm [resolvable:$true] %s100
      %103 = dma.vmem_to_hbm [thread:$0]  %s99, 128, %s101, [#allocation4]
    $region17: #{circles_v3_forward.1} parent=1 // pred_fallthru
      _
    // Predicated region
    $region18: #{circles_v3_forward.1} parent=1 // pred_check
      _
    $region19: #{circles_v3_forward.1} parent=1 // pred_check_branch
      %105 = sbr.rel (0) target = $region21
    $region20: #{circles_v3_forward.1} parent=1 // pred_region
      %107 = dma.done [#allocation4], 128
    $region21: #{circles_v3_forward.1} parent=1 // pred_fallthru
      _
    %108 = vsyncpa [#allocation4], 1

</llo_original>
